<compile_context>
chip_gen: v7x
topology: tpu7x:2x2x1
jax: 0.10.0
libtpu: 0.0.40
codegen_flags: <defaults>
</compile_context>

<pallas_src>
import functools

import jax
import jax.numpy as jnp
import numpy as np
from jax import lax
from jax.experimental import pallas as pl
from jax.experimental.pallas import tpu as pltpu

GAMMA = 2.0
ALPHA = 0.25
EPSILON = 1e-9


def _tpu_hw_defaults():
    """Returns (per-TensorCore VMEM bytes, TensorCores per device), generation-aware."""
    try:
        kind = jax.devices()[0].device_kind.lower()
    except Exception:
        kind = ""
    is_v7 = ("v7" in kind) or ("tpu7" in kind)
    num_tc = 2 if is_v7 else 1                       # v5e/v6e: 1 TC; v7x: 2 TCs/chip
    vmem_cap = (64 if is_v7 else 128) * 1024 * 1024  # per-TC physical VMEM
    try:
        # Prefer the runtime-reported capacity when available (guarded: fallback above).
        vmem_cap = min(vmem_cap, int(pltpu.get_tpu_info().vmem_capacity_bytes))
    except Exception:
        pass
    return vmem_cap, num_tc


def _focal_softmax_kernel(x_ref, t_ref, out_ref, acc_ref, *,
                          n_rows, tm, tiles_per_chunk, gamma, alpha, epsilon):
    c_idx = pl.program_id(0)   # "parallel" chunk axis (sharded across TCs on v7x)
    j = pl.program_id(1)       # "arbitrary" reduction axis within the chunk

    @pl.when(j == 0)
    def _init():
        acc_ref[...] = jnp.zeros_like(acc_ref)

    x = x_ref[...]             # (tm, C) in the input dtype (f32 or bf16)
    t = t_ref[...]             # (tm, 1) int32, assumed in [0, C)

    # Target gather in log-domain on the raw logits: the (tm, C) compare/select runs
    # on the input dtype (2x elements per vreg for bf16) and selecting the exact
    # logit is lossless.
    col = lax.broadcasted_iota(jnp.int32, x.shape, 1)
    x_t = jnp.sum(jnp.where(col == t, x, 0.0), axis=-1,
                  keepdims=True).astype(jnp.float32)         # (tm, 1) raw target logit

    # Softmax denominator. Row max is exact in any dtype; exp runs in f32 (EUP) for
    # accuracy — the f32 cast fuses into the subtraction.
    m = jnp.max(x, axis=-1, keepdims=True).astype(jnp.float32)
    s = jnp.sum(jnp.exp(x.astype(jnp.float32) - m), axis=-1, keepdims=True)

    logp = (x_t - m) - jnp.log(s)                            # log softmax(target), (tm,1)
    p_t = jnp.exp(logp)
    log_term = jnp.log(p_t + epsilon)                        # matches torch (p + eps).log()

    one_minus = 1.0 - p_t
    if float(gamma) == 2.0:                                  # avoid generic pow for default
        mod = one_minus * one_minus
    else:
        mod = jnp.power(one_minus, float(gamma))
    loss_row = (-alpha) * mod * log_term                     # (tm, 1)

    # Per-step collapse (XLU has slack) into a lane-dense accumulator: one vreg RMW
    # per step instead of a (tm, 1) read-modify-write pass.
    def _accumulate(vals):
        acc_ref[...] += jnp.broadcast_to(jnp.sum(vals, keepdims=True), acc_ref.shape)

    # Mask padded rows only on tiles that can actually contain them (last partial
    # tile and redundant clamped tail tiles); interior tiles take the fast path.
    tile_idx = c_idx * tiles_per_chunk + j   # unclamped: redundant tiles land >= n_rows
    needs_mask = (tile_idx + 1) * tm > n_rows

    @pl.when(jnp.logical_not(needs_mask))
    def _acc_interior():
        _accumulate(loss_row)

    @pl.when(needs_mask)
    def _acc_edge():
        row = lax.broadcasted_iota(jnp.int32, (tm, 1), 0) + tile_idx * tm
        _accumulate(jnp.where(row < n_rows, loss_row, 0.0))

    @pl.when(j == pl.num_programs(1) - 1)
    def _finalize():
        out_ref[...] = acc_ref[...]          # one lane-dense (8,128) writeback per chunk


def focal_loss(logits, target, *, gamma=GAMMA, alpha=ALPHA, epsilon=EPSILON,
               tm=None, num_chunks=None, vmem_limit_bytes=None):
    """Softmax focal loss with reduction='mean'.

    logits: (N, C) float32 or bfloat16. bfloat16 is the preferred input dtype (the
            kernel is HBM-streaming-bound; bf16 halves bytes moved while exp/log
            stay in f32 so results still match the f32 reference).
    target: (N,) integer class ids in [0, C).
    Returns a scalar float32.
    """
    n, c = logits.shape
    t2d = target.astype(jnp.int32).reshape(n, 1)
    itemsize = jnp.dtype(logits.dtype).itemsize

    vmem_cap, num_tc = _tpu_hw_defaults()
    if vmem_limit_bytes is None:
        vmem_limit_bytes = int(vmem_cap * 3 // 4)    # 96 MiB on v5e/v6e, 48 MiB on v7x
    if num_chunks is None:
        num_chunks = num_tc                          # 1 on v5e/v6e, 2 on v7x

    if tm is None:
        # Fit 2 double-buffered (tm, C) input blocks + ~3 f32 full-tile temporaries
        # (cast/exp/iota) in ~60% of the scoped limit; cap at 2048 rows per step.
        block_budget = int(vmem_limit_bytes * 0.6)
        per_row_bytes = c * (2 * itemsize + 3 * 4)
        tm = max(8, min(2048, (block_budget // per_row_bytes) // 8 * 8))

    if n < 8:
        tm_eff = n                                   # full-dim block (== array dim)
    else:
        tm_eff = max(8, min(int(tm), (n // 8) * 8))  # multiple of 8, <= row count

    tiles_total = pl.cdiv(n, tm_eff)
    nc = max(1, min(int(num_chunks), tiles_total))
    tpc = pl.cdiv(tiles_total, nc)
    nc = pl.cdiv(tiles_total, tpc)                   # every chunk owns >= 1 real tile

    def tile_map(ci, ji):
        # Redundant tail iterations clamp onto the last real tile; their rows are
        # masked out inside the kernel, so the duplicate load is harmless.
        return (jnp.minimum(ci * tpc + ji, tiles_total - 1), 0)

    kernel = functools.partial(
        _focal_softmax_kernel, n_rows=n, tm=tm_eff, tiles_per_chunk=tpc,
        gamma=float(gamma), alpha=float(alpha), epsilon=float(epsilon))

    partials = pl.pallas_call(
        kernel,
        out_shape=jax.ShapeDtypeStruct((nc * 8, 128), jnp.float32),
        grid_spec=pltpu.PrefetchScalarGridSpec(
            num_scalar_prefetch=0,
            grid=(nc, tpc),
            in_specs=[
                # TODO(synk): if profiling shows exposed DMA on v5e/v6e, add
                # pipeline_mode=pl.Buffered(3) here (do NOT deepen buffering on v7x).
                pl.BlockSpec((tm_eff, c), tile_map),
                pl.BlockSpec((tm_eff, 1), tile_map),
            ],
            out_specs=pl.BlockSpec((8, 128), lambda ci, ji: (ci, 0)),
            scratch_shapes=[pltpu.VMEM((8, 128), jnp.float32)],
        ),
        compiler_params=pltpu.CompilerParams(
            dimension_semantics=("parallel", "arbitrary"),
            vmem_limit_bytes=int(vmem_limit_bytes),
        ),
    )(logits, t2d)

    per_chunk = partials.reshape(nc, 8, 128)[:, 0, 0]   # one identical value per block
    return jnp.sum(per_chunk) / float(n)


def _reference_focal(logits, target, gamma=GAMMA, alpha=ALPHA, epsilon=EPSILON):
    c = logits.shape[-1]
    one_hot = jax.nn.one_hot(target, c, dtype=jnp.float32)
    p = jax.nn.softmax(logits.astype(jnp.float32), axis=-1)
    loss = -alpha * one_hot * jnp.power(1.0 - p, gamma) * jnp.log(p + epsilon)
    return jnp.mean(jnp.sum(loss, axis=1))


if __name__ == "__main__":
    key = jax.random.PRNGKey(0)
    k1, k2, k3, k4, k5, k6 = jax.random.split(key, 6)

    # Case 1: ragged batch — exercises cdiv grid, edge-tile masking, and a forced
    # 2-chunk split with a redundant clamped tail tile.
    N1, C1 = 23, 12
    logits1 = jax.random.normal(k1, (N1, C1), dtype=jnp.float32) * 2.0
    target1 = jax.random.randint(k2, (N1,), 0, C1, dtype=jnp.int32)
    out1 = jax.block_until_ready(focal_loss(logits1, target1, tm=8, num_chunks=2))
    np.testing.assert_allclose(np.asarray(out1),
                               np.asarray(_reference_focal(logits1, target1)),
                               rtol=1e-5, atol=1e-5)

    # Case 2: lane-aligned f32 with all defaults (auto tm / vmem limit / chunk count).
    N2, C2 = 64, 128
    logits2 = jax.random.normal(k3, (N2, C2), dtype=jnp.float32) * 2.0
    target2 = jax.random.randint(k4, (N2,), 0, C2, dtype=jnp.int32)
    out2 = jax.block_until_ready(focal_loss(logits2, target2))
    np.testing.assert_allclose(np.asarray(out2),
                               np.asarray(_reference_focal(logits2, target2)),
                               rtol=1e-5, atol=1e-5)

    # Case 3: bf16 logits (preferred input dtype); exp/log remain f32 in the kernel.
    N3, C3 = 128, 64
    logits3 = (jax.random.normal(k5, (N3, C3), dtype=jnp.float32) * 2.0).astype(jnp.bfloat16)
    target3 = jax.random.randint(k6, (N3,), 0, C3, dtype=jnp.int32)
    out3 = jax.block_until_ready(focal_loss(logits3, target3))
    np.testing.assert_allclose(np.asarray(out3),
                               np.asarray(_reference_focal(logits3, target3)),
                               rtol=1e-4, atol=1e-4)

    print("KERNEL_OK")
</pallas_src>

<mosaic_0001>
module attributes {stable_mosaic.version = 11 : i64} {
  func.func @_focal_softmax_kernel(%arg0: i32, %arg1: i32, %arg2: memref<8x12xf32, #tpu.memory_space<vmem>>, %arg3: memref<8x1xi32, #tpu.memory_space<vmem>>, %arg4: memref<8x128xf32, #tpu.memory_space<vmem>>, %arg5: memref<8x128xf32, #tpu.memory_space<vmem>>) attributes {dimension_semantics = [#tpu.dimension_semantics<parallel>, #tpu.dimension_semantics<arbitrary>], iteration_bounds = array<i64: 2, 2>, scalar_prefetch = 0 : i64, scratch_operands = 1 : i64, tpu.core_type = #tpu.core_type<tc>, window_params = [{transform_indices = @transform_0, window_bounds = array<i64: 8, 12>}, {transform_indices = @transform_1, window_bounds = array<i64: 8, 1>}, {transform_indices = @transform_2, window_bounds = array<i64: 8, 128>}]} {
    %c0_i32 = arith.constant 0 : i32
    %0 = arith.cmpi eq, %arg1, %c0_i32 : i32
    %1 = arith.extui %0 : i1 to i32
    %c0_i32_0 = arith.constant 0 : i32
    %2 = arith.cmpi ne, %1, %c0_i32_0 : i32
    scf.if %2 {
      %cst_14 = arith.constant 0.000000e+00 : f32
      %45 = vector.broadcast %cst_14 : f32 to vector<8x128xf32>
      %c0_15 = arith.constant 0 : index
      %c0_16 = arith.constant 0 : index
      %46 = vector.load %arg5[%c0_15, %c0_16] : memref<8x128xf32, #tpu.memory_space<vmem>>, vector<8x128xf32>
      tpu.vector_store %arg5[%c0_15, %c0_16], %45 {strides = array<i32>} : memref<8x128xf32, #tpu.memory_space<vmem>>, vector<8x128xf32>,
    } else {
    }
    %c0 = arith.constant 0 : index
    %c0_1 = arith.constant 0 : index
    %3 = vector.load %arg2[%c0, %c0_1] : memref<8x12xf32, #tpu.memory_space<vmem>>, vector<8x12xf32>
    %c0_2 = arith.constant 0 : index
    %c0_3 = arith.constant 0 : index
    %4 = vector.load %arg3[%c0_2, %c0_3] : memref<8x1xi32, #tpu.memory_space<vmem>>, vector<8x1xi32>
    %5 = tpu.iota {dimensions = array<i32: 1>} : vector<8x12xi32>
    %6 = vector.broadcast %4 : vector<8x1xi32> to vector<8x12xi32>
    %7 = arith.cmpi eq, %5, %6 : vector<8x12xi32>
    %cst = arith.constant 0.000000e+00 : f32
    %8 = vector.broadcast %cst : f32 to vector<8x12xf32>
    %9 = arith.select %7, %3, %8 : vector<8x12xi1>, vector<8x12xf32>
    %cst_4 = arith.constant dense<0.000000e+00> : vector<8xf32>
    %10 = vector.multi_reduction <add>, %9, %cst_4 [1] : vector<8x12xf32> to vector<8xf32>
    %11 = vector.shape_cast %10 : vector<8xf32> to vector<8x1xf32>
    %cst_5 = arith.constant dense<0xFF800000> : vector<8xf32>
    %12 = vector.multi_reduction <maximumf>, %3, %cst_5 [1] : vector<8x12xf32> to vector<8xf32>
    %13 = vector.shape_cast %12 : vector<8xf32> to vector<8x1xf32>
    %14 = vector.broadcast %13 : vector<8x1xf32> to vector<8x12xf32>
    %15 = arith.subf %3, %14 : vector<8x12xf32>
    %16 = math.exp %15 : vector<8x12xf32>
    %cst_6 = arith.constant dense<0.000000e+00> : vector<8xf32>
    %17 = vector.multi_reduction <add>, %16, %cst_6 [1] : vector<8x12xf32> to vector<8xf32>
    %18 = vector.shape_cast %17 : vector<8xf32> to vector<8x1xf32>
    %19 = arith.subf %11, %13 : vector<8x1xf32>
    %20 = math.log %18 : vector<8x1xf32>
    %21 = arith.subf %19, %20 : vector<8x1xf32>
    %22 = math.exp %21 : vector<8x1xf32>
    %cst_7 = arith.constant 9.99999971E-10 : f32
    %23 = vector.broadcast %cst_7 : f32 to vector<8x1xf32>
    %24 = arith.addf %22, %23 : vector<8x1xf32>
    %25 = math.log %24 : vector<8x1xf32>
    %cst_8 = arith.constant 1.000000e+00 : f32
    %26 = vector.broadcast %cst_8 : f32 to vector<8x1xf32>
    %27 = arith.subf %26, %22 : vector<8x1xf32>
    %28 = arith.mulf %27, %27 : vector<8x1xf32>
    %cst_9 = arith.constant -2.500000e-01 : f32
    %29 = vector.broadcast %cst_9 : f32 to vector<8x1xf32>
    %30 = arith.mulf %29, %28 : vector<8x1xf32>
    %31 = arith.mulf %30, %25 : vector<8x1xf32>
    %c2_i32 = arith.constant 2 : i32
    %32 = arith.muli %arg0, %c2_i32 : i32
    %33 = arith.addi %32, %arg1 : i32
    %c1_i32 = arith.constant 1 : i32
    %34 = arith.addi %33, %c1_i32 : i32
    %c8_i32 = arith.constant 8 : i32
    %35 = arith.muli %34, %c8_i32 : i32
    %c23_i32 = arith.constant 23 : i32
    %36 = arith.cmpi sgt, %35, %c23_i32 : i32
    %true = arith.constant true
    %37 = arith.xori %36, %true : i1
    %38 = arith.extui %37 : i1 to i32
    %c0_i32_10 = arith.constant 0 : i32
    %39 = arith.cmpi ne, %38, %c0_i32_10 : i32
    scf.if %39 {
      %c0_14 = arith.constant 0 : index
      %c0_15 = arith.constant 0 : index
      %45 = vector.load %arg5[%c0_14, %c0_15] : memref<8x128xf32, #tpu.memory_space<vmem>>, vector<8x128xf32>
      %46 = vector.shape_cast %31 : vector<8x1xf32> to vector<1x8x1xf32>
      %cst_16 = arith.constant dense<0.000000e+00> : vector<1xf32>
      %47 = vector.multi_reduction <add>, %46, %cst_16 [1, 2] : vector<1x8x1xf32> to vector<1xf32>
      %48 = vector.shape_cast %47 : vector<1xf32> to vector<1x1x1xf32>
      %49 = vector.extract %48[0, 0, 0] : f32 from vector<1x1x1xf32>
      %50 = vector.broadcast %49 : f32 to vector<1x1xf32>
      %51 = vector.shape_cast %50 : vector<1x1xf32> to vector<1x1xf32>
      %52 = vector.broadcast %51 : vector<1x1xf32> to vector<8x128xf32>
      %53 = arith.addf %45, %52 : vector<8x128xf32>
      %c0_17 = arith.constant 0 : index
      %c0_18 = arith.constant 0 : index
      %54 = vector.load %arg5[%c0_17, %c0_18] : memref<8x128xf32, #tpu.memory_space<vmem>>, vector<8x128xf32>
      tpu.vector_store %arg5[%c0_17, %c0_18], %53 {strides = array<i32>} : memref<8x128xf32, #tpu.memory_space<vmem>>, vector<8x128xf32>,
    } else {
    }
    %40 = arith.extui %36 : i1 to i32
    %c0_i32_11 = arith.constant 0 : i32
    %41 = arith.cmpi ne, %40, %c0_i32_11 : i32
    scf.if %41 {
      %45 = tpu.iota {dimensions = array<i32: 0>} : vector<8x1xi32>
      %c8_i32_14 = arith.constant 8 : i32
      %46 = arith.muli %33, %c8_i32_14 : i32
      %47 = vector.broadcast %46 : i32 to vector<8x1xi32>
      %48 = arith.addi %45, %47 : vector<8x1xi32>
      %c23_i32_15 = arith.constant 23 : i32
      %49 = vector.broadcast %c23_i32_15 : i32 to vector<8x1xi32>
      %50 = arith.cmpi slt, %48, %49 : vector<8x1xi32>
      %cst_16 = arith.constant 0.000000e+00 : f32
      %51 = vector.broadcast %cst_16 : f32 to vector<8x1xf32>
      %52 = arith.select %50, %31, %51 : vector<8x1xi1>, vector<8x1xf32>
      %c0_17 = arith.constant 0 : index
      %c0_18 = arith.constant 0 : index
      %53 = vector.load %arg5[%c0_17, %c0_18] : memref<8x128xf32, #tpu.memory_space<vmem>>, vector<8x128xf32>
      %54 = vector.shape_cast %52 : vector<8x1xf32> to vector<1x8x1xf32>
      %cst_19 = arith.constant dense<0.000000e+00> : vector<1xf32>
      %55 = vector.multi_reduction <add>, %54, %cst_19 [1, 2] : vector<1x8x1xf32> to vector<1xf32>
      %56 = vector.shape_cast %55 : vector<1xf32> to vector<1x1x1xf32>
      %57 = vector.extract %56[0, 0, 0] : f32 from vector<1x1x1xf32>
      %58 = vector.broadcast %57 : f32 to vector<1x1xf32>
      %59 = vector.shape_cast %58 : vector<1x1xf32> to vector<1x1xf32>
      %60 = vector.broadcast %59 : vector<1x1xf32> to vector<8x128xf32>
      %61 = arith.addf %53, %60 : vector<8x128xf32>
      %c0_20 = arith.constant 0 : index
      %c0_21 = arith.constant 0 : index
      %62 = vector.load %arg5[%c0_20, %c0_21] : memref<8x128xf32, #tpu.memory_space<vmem>>, vector<8x128xf32>
      tpu.vector_store %arg5[%c0_20, %c0_21], %61 {strides = array<i32>} : memref<8x128xf32, #tpu.memory_space<vmem>>, vector<8x128xf32>,
    } else {
    }
    %c1_i32_12 = arith.constant 1 : i32
    %42 = arith.cmpi eq, %arg1, %c1_i32_12 : i32
    %43 = arith.extui %42 : i1 to i32
    %c0_i32_13 = arith.constant 0 : i32
    %44 = arith.cmpi ne, %43, %c0_i32_13 : i32
    scf.if %44 {
      %c0_14 = arith.constant 0 : index
      %c0_15 = arith.constant 0 : index
      %45 = vector.load %arg5[%c0_14, %c0_15] : memref<8x128xf32, #tpu.memory_space<vmem>>, vector<8x128xf32>
      %c0_16 = arith.constant 0 : index
      %c0_17 = arith.constant 0 : index
      %46 = vector.load %arg4[%c0_16, %c0_17] : memref<8x128xf32, #tpu.memory_space<vmem>>, vector<8x128xf32>
      tpu.vector_store %arg4[%c0_16, %c0_17], %45 {strides = array<i32>} : memref<8x128xf32, #tpu.memory_space<vmem>>, vector<8x128xf32>,
    } else {
    }
    return
  }
  func.func @transform_0(%arg0: i32, %arg1: i32) -> (i32, i32) {
    %c2_i32 = arith.constant 2 : i32
    %0 = arith.muli %arg0, %c2_i32 : i32
    %1 = arith.addi %0, %arg1 : i32
    %c2_i32_0 = arith.constant 2 : i32
    %2 = arith.minsi %1, %c2_i32_0 : i32
    %c0_i32 = arith.constant 0 : i32
    %c0_i32_1 = arith.constant 0 : i32
    return %2, %c0_i32 : i32, i32
  }
  func.func @transform_1(%arg0: i32, %arg1: i32) -> (i32, i32) {
    %c2_i32 = arith.constant 2 : i32
    %0 = arith.muli %arg0, %c2_i32 : i32
    %1 = arith.addi %0, %arg1 : i32
    %c2_i32_0 = arith.constant 2 : i32
    %2 = arith.minsi %1, %c2_i32_0 : i32
    %c0_i32 = arith.constant 0 : i32
    %c0_i32_1 = arith.constant 0 : i32
    return %2, %c0_i32 : i32, i32
  }
  func.func @transform_2(%arg0: i32, %arg1: i32) -> (i32, i32) {
    %c0_i32 = arith.constant 0 : i32
    %c0_i32_0 = arith.constant 0 : i32
    return %arg0, %c0_i32 : i32, i32
  }
}

</mosaic_0001>

<llo_original>
// kernel: tpu_custom_call.1
$region0: #{tpu_custom_call.1}
  #allocation0 [shape = 'u32[]', space=smem, size = 0x4, offset = 0x4, fixed_abs, tag = 'smem constant byte address 0x4 - core index']
  #allocation1 [shape = 'u32[144,128]{1,0:T(1,128)}', space=vmem, size = 0x12000, scoped, tag = 'internal scratch']
  #allocation2 [shape = 'f32[8,128]{1,0:T(8,128)}', space=vmem, size = 0x1000, scoped, tag = 'scratch operand']
  %s0 = inlined_call_operand.hbm [shape: f32[23,12], index: 0, kind: input, shape index: {}]
  %s1 = inlined_call_operand.hbm [shape: s32[23,1], index: 1, kind: input, shape index: {}]
  %s2 = inlined_call_operand.hbm [shape: f32[16,128], index: 2, kind: output, shape index: {}]
  %s3 = sld [smem:[#allocation0]]
  $region65: #{tpu_custom_call.1} parent=0
    _
  %s5 = ssub.s32 1, %s3
  %s6 = scalar_select 0, %s5, %s3
  $region1: #{tpu_custom_call.1} parent=0
    #allocation3 [shape = 'u8[8192]{0}', space=vmem, size = 0x2000, scoped, tag = 'input window, operand 0']
    #allocation4 [shape = 's32[2]{0}', space=sflag, size = 0x8, scoped, tag = 'scoped memory for tpu_custom_call.1']
    #allocation5 [shape = 's32[2]{0}', space=sflag, size = 0x8, scoped, tag = 'scoped memory for tpu_custom_call.1']
    #allocation6 [shape = 'u8[8192]{0}', space=vmem, size = 0x2000, scoped, tag = 'input window, operand 1']
    #allocation7 [shape = 's32[2]{0}', space=sflag, size = 0x8, scoped, tag = 'scoped memory for tpu_custom_call.1']
    #allocation8 [shape = 'u8[8192]{0}', space=vmem, size = 0x2000, scoped, tag = 'output window, operand 0']
    %7 = vsyncpa [#allocation4], 0
    %s8 = scalar_lea.sflag [#allocation4], 1
    %9 = vsyncpa %s8, 0
    %10 = vsyncpa [#allocation7], 0
    %s11 = scalar_lea.sflag [#allocation7], 1
    %12 = vsyncpa %s11, 0
    %13 = vsyncpa [#allocation5], 0
    %s14 = scalar_lea.sflag [#allocation5], 1
    %15 = vsyncpa %s14, 0
    loop: start=0, step=1, limit=6
    $region2: #{tpu_custom_call.1} parent=1 // loop_pre_header
      _
    $region3: #{tpu_custom_call.1} parent=1 // loop_header
      %s17 = sphi 0, %s21
      %p18 = scmp.ge.s32.totalorder %s17, 6
      %s24 = sphi 0, %s36
      %s25 = sphi 0, %s32
      %s26 = sphi 0, %s24
      %s27 = sphi 0, %s25
      %s28 = sphi 0, %s26
      %s29 = sphi 0, %s27
      %s47 = sphi 0, %s49
      %s50 = sphi 0, %s47
      %s51 = sphi 0, %s50
      %s67 = sphi 0, %s51
      %s81 = sphi 0, %s83
      %s84 = sphi 0, %s81
      %s85 = sphi 0, %s84
      %s101 = sphi 0, %s85
      %s107 = sphi 0, %s109
      %s110 = sphi 0, %s107
      %s111 = sphi 0, %s110
      %s127 = sphi 0, %s111
    $region4: #{tpu_custom_call.1} parent=1 // loop_header_branch
      %20 = sbr.rel (%p18) target = $region8
    $region5: #{tpu_custom_call.1} parent=1 // loop_body
      %s22 = ssub.s32 %s17, 1
      %s23 = ssub.s32 %s17, 2
      %s30 = sadd.s32 1, %s25
      %p31 = scmp.ge.s32.totalorder %s30, 2
      %s32 = scalar_select %p31, 0, %s30
      %s33 = sadd.s32 1, %s24
      %s34 = scalar_select %p31, %s33, %s24
      %p35 = scmp.ge.s32.totalorder %s34, 2
      %s36 = scalar_select %p35, 0, %s34
      %s37 = smul.u32 %s24, 2
      %s38 = sadd.s32 %s37, %s25
      %p39 = scmp.lt.s32.totalorder %s38, 2
      %s40 = scalar_select %p39, %s38, 2
      %s41 = smul.u32 %s36, 2
      %s42 = sadd.s32 %s41, %s32
      %p43 = scmp.lt.s32.totalorder %s42, 2
      %s44 = scalar_select %p43, %s42, 2
      %s45 = ssub.s32 %s40, %s44
      %p46 = scmp.eq.s32.totalorder %s45, 0
      %s48 = sadd.s32 %s47, 1
      %s49 = scalar_select %p46, %s47, %s48
      %p52 = pneg %p46
      %p53 = scmp.eq.s32.totalorder %s17, 3
      %p54 = por %p52, %p53
      %p55 = scmp.ne.s32.totalorder %s47, %s50
      %p56 = scmp.eq.s32.totalorder %s17, 0
      %p57 = por %p55, %p56
      %p58 = scmp.ne.s32.totalorder %s47, %s50
      %p59 = scmp.eq.s32.totalorder %s22, 3
      %p60 = por %p58, %p59
      %p61 = scmp.ne.s32.totalorder %s50, %s51
      %p62 = scmp.eq.s32.totalorder %s22, 0
      %p63 = por %p61, %p62
      %p64 = scmp.ne.s32.totalorder %s50, %s51
      %p65 = scmp.eq.s32.totalorder %s23, 3
      %p66 = por %p64, %p65
      %p68 = scmp.ne.s32.totalorder %s51, %s67
      %p69 = scmp.eq.s32.totalorder %s23, 0
      %p70 = por %p68, %p69
      %s71 = smul.u32 %s24, 2
      %s72 = sadd.s32 %s71, %s25
      %p73 = scmp.lt.s32.totalorder %s72, 2
      %s74 = scalar_select %p73, %s72, 2
      %s75 = smul.u32 %s36, 2
      %s76 = sadd.s32 %s75, %s32
      %p77 = scmp.lt.s32.totalorder %s76, 2
      %s78 = scalar_select %p77, %s76, 2
      %s79 = ssub.s32 %s74, %s78
      %p80 = scmp.eq.s32.totalorder %s79, 0
      %s82 = sadd.s32 %s81, 1
      %s83 = scalar_select %p80, %s81, %s82
      %p86 = pneg %p80
      %p87 = scmp.eq.s32.totalorder %s17, 3
      %p88 = por %p86, %p87
      %p89 = scmp.ne.s32.totalorder %s81, %s84
      %p90 = scmp.eq.s32.totalorder %s17, 0
      %p91 = por %p89, %p90
      %p92 = scmp.ne.s32.totalorder %s81, %s84
      %p93 = scmp.eq.s32.totalorder %s22, 3
      %p94 = por %p92, %p93
      %p95 = scmp.ne.s32.totalorder %s84, %s85
      %p96 = scmp.eq.s32.totalorder %s22, 0
      %p97 = por %p95, %p96
      %p98 = scmp.ne.s32.totalorder %s84, %s85
      %p99 = scmp.eq.s32.totalorder %s23, 3
      %p100 = por %p98, %p99
      %p102 = scmp.ne.s32.totalorder %s85, %s101
      %p103 = scmp.eq.s32.totalorder %s23, 0
      %p104 = por %p102, %p103
      %s105 = ssub.s32 %s24, %s36
      %p106 = scmp.eq.s32.totalorder %s105, 0
      %s108 = sadd.s32 %s107, 1
      %s109 = scalar_select %p106, %s107, %s108
      %p112 = pneg %p106
      %p113 = scmp.eq.s32.totalorder %s17, 3
      %p114 = por %p112, %p113
      %p115 = scmp.ne.s32.totalorder %s107, %s110
      %p116 = scmp.eq.s32.totalorder %s17, 0
      %p117 = por %p115, %p116
      %p118 = scmp.ne.s32.totalorder %s107, %s110
      %p119 = scmp.eq.s32.totalorder %s22, 3
      %p120 = por %p118, %p119
      %p121 = scmp.ne.s32.totalorder %s110, %s111
      %p122 = scmp.eq.s32.totalorder %s22, 0
      %p123 = por %p121, %p122
      %p124 = scmp.ne.s32.totalorder %s110, %s111
      %p125 = scmp.eq.s32.totalorder %s23, 3
      %p126 = por %p124, %p125
      %p128 = scmp.ne.s32.totalorder %s111, %s127
      %p129 = scmp.eq.s32.totalorder %s23, 0
      %p130 = por %p128, %p129
      %p131 = scmp.le.s32.totalorder 1, %s17
      %p132 = scmp.lt.s32.totalorder %s17, 5
      %p133 = pnand %p131, %p132
      %p134 = pneg %p133
      // Predicated region
      $region9: #{tpu_custom_call.1} parent=5 // pred_check
        _
      $region10: #{tpu_custom_call.1} parent=5 // pred_check_branch
        %136 = sbr.rel (%p133) target = $region12
      $region11: #{tpu_custom_call.1} parent=5 // pred_region
        %s137 = ssub.s32 %s17, 1
      $region12: #{tpu_custom_call.1} parent=5 // pred_fallthru
        _
      %p138 = scmp.lt.s32.totalorder %s17, 4
      // Predicated region
      $region13: #{tpu_custom_call.1} parent=5 // pred_check
        %p139 = pneg %p138
      $region14: #{tpu_custom_call.1} parent=5 // pred_check_branch
        %141 = sbr.rel (%p139) target = $region16
      $region15: #{tpu_custom_call.1} parent=5 // pred_region
        // Predicated region
        $region17: #{tpu_custom_call.1} parent=15 // pred_check
          %p142 = pneg %p57
        $region18: #{tpu_custom_call.1} parent=15 // pred_check_branch
          %144 = sbr.rel (%p142) target = $region20
        $region19: #{tpu_custom_call.1} parent=15 // pred_region
          %s145 = sand.u32 %s47, 1
          %s146 = scalar_lea.sflag [#allocation4], %s145
          %s147 = sand.u32 %s47, 1
          %s148 = smul.addr %s147, 8
          %s149 = scalar_lea.vmem [#allocation3], %s148
          %s150 = smul.u32 %s24, 2
          %s151 = sadd.s32 %s150, %s25
          %p152 = scmp.lt.s32.totalorder %s151, 2
          %s153 = scalar_select %p152, %s151, 2
          %s155 = ssub.s32 128, 128
          %156 = vsyncadd %s146, %s155
          %s157 = smul.addr %s153, 128
          %s158 = scalar_lea.hbm %s0, %s157
          %s160 = sshll.u32 %s149, 4
          %s161 = int_to_ptr.vmem [resolvable:$true] %s160
          %163 = dma.hbm_to_vmem [thread:$0]  %s158, 128, %s161, %s146
        $region20: #{tpu_custom_call.1} parent=15 // pred_fallthru
          _
        // Predicated region
        $region21: #{tpu_custom_call.1} parent=15 // pred_check
          %p164 = pneg %p91
        $region22: #{tpu_custom_call.1} parent=15 // pred_check_branch
          %166 = sbr.rel (%p164) target = $region24
        $region23: #{tpu_custom_call.1} parent=15 // pred_region
          %s167 = sand.u32 %s81, 1
          %s168 = scalar_lea.sflag [#allocation7], %s167
          %s169 = sand.u32 %s81, 1
          %s170 = smul.addr %s169, 8
          %s171 = scalar_lea.vmem [#allocation6], %s170
          %s172 = smul.u32 %s24, 2
          %s173 = sadd.s32 %s172, %s25
          %p174 = scmp.lt.s32.totalorder %s173, 2
          %s175 = scalar_select %p174, %s173, 2
          %s177 = ssub.s32 128, 128
          %178 = vsyncadd %s168, %s177
          %s179 = smul.addr %s175, 128
          %s180 = scalar_lea.hbm %s1, %s179
          %s182 = sshll.u32 %s171, 4
          %s183 = int_to_ptr.vmem [resolvable:$true] %s182
          %185 = dma.hbm_to_vmem [thread:$0]  %s180, 128, %s183, %s168
        $region24: #{tpu_custom_call.1} parent=15 // pred_fallthru
          _
      $region16: #{tpu_custom_call.1} parent=5 // pred_fallthru
        _
      %p186 = scmp.le.s32.totalorder 1, %s17
      %p187 = scmp.lt.s32.totalorder %s17, 5
      %p188 = pnand %p186, %p187
      %p189 = pneg %p188
      // Predicated region
      $region25: #{tpu_custom_call.1} parent=5 // pred_check
        _
      $region26: #{tpu_custom_call.1} parent=5 // pred_check_branch
        %191 = sbr.rel (%p188) target = $region28
      $region27: #{tpu_custom_call.1} parent=5 // pred_region
        %s192 = ssub.s32 %s17, 1
        %s193 = sand.u32 %s50, 1
        %s194 = scalar_lea.sflag [#allocation4], %s193
        %s195 = sand.u32 %s50, 1
        %s196 = smul.addr %s195, 8
        %s197 = scalar_lea.vmem [#allocation3], %s196
        // Predicated region
        $region29: #{tpu_custom_call.1} parent=27 // pred_check
          %p198 = pneg %p63
        $region30: #{tpu_custom_call.1} parent=27 // pred_check_branch
          %200 = sbr.rel (%p198) target = $region32
        $region31: #{tpu_custom_call.1} parent=27 // pred_region
          %201 = dma.done %s194, 128
        $region32: #{tpu_custom_call.1} parent=27 // pred_fallthru
          _
        %s202 = sand.u32 %s84, 1
        %s203 = scalar_lea.sflag [#allocation7], %s202
        %s204 = sand.u32 %s84, 1
        %s205 = smul.addr %s204, 8
        %s206 = scalar_lea.vmem [#allocation6], %s205
        // Predicated region
        $region33: #{tpu_custom_call.1} parent=27 // pred_check
          %p207 = pneg %p97
        $region34: #{tpu_custom_call.1} parent=27 // pred_check_branch
          %209 = sbr.rel (%p207) target = $region36
        $region35: #{tpu_custom_call.1} parent=27 // pred_region
          %210 = dma.done %s203, 128
        $region36: #{tpu_custom_call.1} parent=27 // pred_fallthru
          _
        %s211 = sand.u32 %s50, 1
        %s212 = scalar_lea.sflag [#allocation4], %s211
        %s213 = sand.u32 %s50, 1
        %s214 = smul.addr %s213, 8
        %s215 = scalar_lea.vmem [#allocation3], %s214
        %p216 = pneg %p63
        %p217 = pneg %p60
        %s218 = sand.u32 %s84, 1
        %s219 = scalar_lea.sflag [#allocation7], %s218
        %s220 = sand.u32 %s84, 1
        %s221 = smul.addr %s220, 8
        %s222 = scalar_lea.vmem [#allocation6], %s221
        %p223 = pneg %p97
        %p224 = pneg %p94
        %p225 = pneg %p123
        %p226 = pneg %p120
        %s227 = sand.u32 %s110, 1
        %s228 = scalar_lea.sflag [#allocation5], %s227
        %s229 = sand.u32 %s110, 1
        %s230 = smul.addr %s229, 8
        %s231 = scalar_lea.vmem [#allocation8], %s230
        %s232 = smul.u32 %s26, 2
        %s233 = sadd.s32 %s232, %s27
        %p234 = scmp.lt.s32.totalorder %s233, 2
        %s235 = scalar_select %p234, %s233, 2
        %s236 = smul.u32 %s26, 2
        %s237 = sadd.s32 %s236, %s27
        %p238 = scmp.lt.s32.totalorder %s237, 2
        %s239 = scalar_select %p238, %s237, 2
        %p240 = scmp.eq.s32.totalorder %s27, 0
        // Predicated region
        $region37: #{tpu_custom_call.1} parent=27 // pred_check
          %p241 = pneg %p240
        $region38: #{tpu_custom_call.1} parent=27 // pred_check_branch
          %243 = sbr.rel (%p241) target = $region40
        $region39: #{tpu_custom_call.1} parent=27 // pred_region
          %244 = vst [vmem:[#allocation2] sm:$0xff] 0.0
        $region40: #{tpu_custom_call.1} parent=27 // pred_fallthru
          _
        %v245 = vld [vmem:[%s197] sm:$0xff]
        %v246 = vld [vmem:[%s206] sm:$0xff]
        %v247 = vlaneseq
        %v248 = vand.u32 %v247, 127
        %249 = vset.pattern.permute.xlu0 0
        %250 = vperm.xlu0 %249, %v246
        %v251 = vpop.permute.xlu0 %250
        %vm252 = vcmp.eq.s32.totalorder %v248, %v251
        %v253 = vsel %vm252, %v245, 0.0
        %vm254 = vcmask 97280
        %v255 = vsel %vm254, %v253, 0.0
        %256 = vadd.xlane.f32.xlu0 %v255
        %v257 = vpop.xlane.xlu0 %256
        %v258 = vsel %vm254, %v245, -inf
        %259 = vmax.xlane.f32.xlu0 %v258
        %v260 = vpop.xlane.xlu0 %259
        %v261 = vsub.f32 %v245, %v260
        %v262 = vmul.f32 %v261, 1.442695
        %v263 = vpow.pop %v262
        %v264 = vsel %vm254, %v263, 0.0
        %265 = vadd.xlane.f32.xlu0 %v264
        %v266 = vpop.xlane.xlu0 %265
        %v267 = vsub.f32 %v257, %v260
        %v268 = vlog2.pop %v266
        %v269 = vmul.f32 %v268, 0.6931472
        %v270 = vsub.f32 %v267, %v269
        %v271 = vmul.f32 %v270, 1.442695
        %v272 = vpow.pop %v271
        %v273 = vadd.f32 %v272, 1e-09
        %v274 = vlog2.pop %v273
        %v275 = vmul.f32 %v274, 0.6931472
        %v276 = vsub.f32 1.0, %v272
        %v277 = vmul.f32 %v276, %v276
        %v278 = vmul.f32 %v277, -0.25
        %v279 = vmul.f32 %v278, %v275
        %s280 = smul.u32 %s26, 2
        %s281 = sadd.s32 %s280, %s27
        %s282 = sadd.s32 %s281, 1
        %s283 = smul.u32 %s282, 8
        %p284 = scmp.gt.s32.totalorder %s283, 23
        %p285 = scmp.le.s32.totalorder %s283, 23
        // Predicated region
        $region41: #{tpu_custom_call.1} parent=27 // pred_check
          %p286 = pneg %p285
        $region42: #{tpu_custom_call.1} parent=27 // pred_check_branch
          %288 = sbr.rel (%p286) target = $region44
        $region43: #{tpu_custom_call.1} parent=27 // pred_region
          %v289 = vld [vmem:[#allocation2] sm:$0xff]
          %vm290 = vcmask 7168
          %v291 = vsel %vm290, %v279, 0.0
          %292 = vadd.xlane.f32.xlu0 %v291
          %v293 = vpop.xlane.xlu0 %292
          %v294 = vrot.slane %v293, 4
          %v295 = vadd.f32 %v293, %v294
          %v296 = vrot.slane %v295, 2
          %v297 = vadd.f32 %v295, %v296
          %v298 = vrot.slane %v297, 1
          %v299 = vadd.f32 %v297, %v298
          %s300 = vtos %v299
          %v301 = vstv %s300
          %v302 = vadd.f32 %v289, %v301
          %303 = vst [vmem:[#allocation2] sm:$0xff] %v302
        $region44: #{tpu_custom_call.1} parent=27 // pred_fallthru
          _
        // Predicated region
        $region45: #{tpu_custom_call.1} parent=27 // pred_check
          %p304 = pneg %p284
        $region46: #{tpu_custom_call.1} parent=27 // pred_check_branch
          %306 = sbr.rel (%p304) target = $region48
        $region47: #{tpu_custom_call.1} parent=27 // pred_region
          %v307 = vlaneseq
          %v308 = vshrl.u32 %v307, 7
          %s309 = smul.u32 %s281, 8
          %v310 = vstv %s309
          %v311 = vadd.s32 %v308, %v310
          %vm312 = vcmp.lt.s32.totalorder %v311, 23
          %v313 = vsel %vm312, %v279, 0.0
          %v314 = vld [vmem:[#allocation2] sm:$0xff]
          %vm315 = vcmask 7168
          %v316 = vsel %vm315, %v313, 0.0
          %317 = vadd.xlane.f32.xlu0 %v316
          %v318 = vpop.xlane.xlu0 %317
          %v319 = vrot.slane %v318, 4
          %v320 = vadd.f32 %v318, %v319
          %v321 = vrot.slane %v320, 2
          %v322 = vadd.f32 %v320, %v321
          %v323 = vrot.slane %v322, 1
          %v324 = vadd.f32 %v322, %v323
          %s325 = vtos %v324
          %v326 = vstv %s325
          %v327 = vadd.f32 %v314, %v326
          %328 = vst [vmem:[#allocation2] sm:$0xff] %v327
        $region48: #{tpu_custom_call.1} parent=27 // pred_fallthru
          _
        %p329 = scmp.eq.s32.totalorder %s27, 1
        // Predicated region
        $region49: #{tpu_custom_call.1} parent=27 // pred_check
          %p330 = pneg %p329
        $region50: #{tpu_custom_call.1} parent=27 // pred_check_branch
          %332 = sbr.rel (%p330) target = $region52
        $region51: #{tpu_custom_call.1} parent=27 // pred_region
          %v333 = vld [vmem:[#allocation2] sm:$0xff]
          %334 = vst [vmem:[%s231] sm:$0xff] %v333
        $region52: #{tpu_custom_call.1} parent=27 // pred_fallthru
          _
        %s335 = sand.u32 %s110, 1
        %s336 = scalar_lea.sflag [#allocation5], %s335
        %s337 = sand.u32 %s110, 1
        %s338 = smul.addr %s337, 8
        %s339 = scalar_lea.vmem [#allocation8], %s338
        // Predicated region
        $region53: #{tpu_custom_call.1} parent=27 // pred_check
          %p340 = pneg %p120
        $region54: #{tpu_custom_call.1} parent=27 // pred_check_branch
          %342 = sbr.rel (%p340) target = $region56
        $region55: #{tpu_custom_call.1} parent=27 // pred_region
          %s344 = ssub.s32 128, 128
          %345 = vsyncadd %s336, %s344
          %s346 = smul.addr %s26, 128
          %s347 = scalar_lea.hbm %s2, %s346
          %s349 = sshll.u32 %s339, 4
          %s350 = int_to_ptr.vmem [resolvable:$true] %s349
          %352 = dma.vmem_to_hbm [thread:$0]  %s350, 128, %s347, %s336
        $region56: #{tpu_custom_call.1} parent=27 // pred_fallthru
          _
      $region28: #{tpu_custom_call.1} parent=5 // pred_fallthru
        _
      %p353 = scmp.le.s32.totalorder 2, %s17
      // Predicated region
      $region57: #{tpu_custom_call.1} parent=5 // pred_check
        %p354 = pneg %p353
      $region58: #{tpu_custom_call.1} parent=5 // pred_check_branch
        %356 = sbr.rel (%p354) target = $region60
      $region59: #{tpu_custom_call.1} parent=5 // pred_region
        %s357 = ssub.s32 %s17, 2
        // Predicated region
        $region61: #{tpu_custom_call.1} parent=59 // pred_check
          %p358 = pneg %p126
        $region62: #{tpu_custom_call.1} parent=59 // pred_check_branch
          %360 = sbr.rel (%p358) target = $region64
        $region63: #{tpu_custom_call.1} parent=59 // pred_region
          %s361 = sand.u32 %s111, 1
          %s362 = scalar_lea.sflag [#allocation5], %s361
          %s363 = sand.u32 %s111, 1
          %s364 = smul.addr %s363, 8
          %s365 = scalar_lea.vmem [#allocation8], %s364
          %366 = dma.done %s362, 128
        $region64: #{tpu_custom_call.1} parent=59 // pred_fallthru
          _
      $region60: #{tpu_custom_call.1} parent=5 // pred_fallthru
        _
    $region6: #{tpu_custom_call.1} parent=1 // loop_footer
      %s21 = sadd.s32 1, %s17
    $region7: #{tpu_custom_call.1} parent=1 // loop_footer_branch
      %16 = sbr.rel target = $region3
    $region8: #{tpu_custom_call.1} parent=1 // loop_exit
      _
    %367 = vsyncpa [#allocation4], 1
    %s368 = scalar_lea.sflag [#allocation4], 1
    %369 = vsyncpa %s368, 1
    %370 = vsyncpa [#allocation7], 1
    %s371 = scalar_lea.sflag [#allocation7], 1
    %372 = vsyncpa %s371, 1
    %373 = vsyncpa [#allocation5], 1
    %s374 = scalar_lea.sflag [#allocation5], 1
    %375 = vsyncpa %s374, 1

</llo_original>
